<compile_context>
chip_gen: v6e
topology: v6e:2x2x1
jax: 0.10.0
libtpu: 0.0.40
codegen_flags: <defaults>
</compile_context>

<pallas_src>
import jax
import jax.numpy as jnp
from jax.experimental import pallas as pl
from jax.experimental.pallas import tpu as pltpu


def _mlp_softmax_kernel(x_ref, w1_ref, b1_ref, w2_ref, b2_ref,
                        w3_ref, b3_ref, w4_ref, b4_ref, o_ref):
    """One (F, TB) column-major batch tile; weights/biases are VMEM-resident."""
    # Cast to bf16 right before the MXU; accumulation stays f32.
    x = x_ref[...].astype(jnp.bfloat16)                       # (F, TB)

    # agg_stats_fc: Linear -> ReLU -> (Dropout: identity in eval) -> Linear -> ReLU
    h1 = jnp.dot(w1_ref[...], x,
                 preferred_element_type=jnp.float32) + b1_ref[...]   # (64, TB)
    h1 = jnp.maximum(h1, 0.0)

    h2 = jnp.dot(w2_ref[...], h1.astype(jnp.bfloat16),
                 preferred_element_type=jnp.float32) + b2_ref[...]   # (32, TB)
    h2 = jnp.maximum(h2, 0.0)

    # fc_combined: Linear -> ReLU -> Linear
    h3 = jnp.dot(w3_ref[...], h2.astype(jnp.bfloat16),
                 preferred_element_type=jnp.float32) + b3_ref[...]   # (16, TB)
    h3 = jnp.maximum(h3, 0.0)

    logits = jnp.dot(w4_ref[...], h3.astype(jnp.bfloat16),
                     preferred_element_type=jnp.float32) + b4_ref[...]  # (2, TB)

    # 2-class softmax == sigmoid of the logit difference (no XLU reductions).
    # Numerically stable: sigmoid(d) = 1/(1+e^-d) if d>=0 else e^d/(1+e^d).
    l0 = logits[0:1, :]
    l1 = logits[1:2, :]
    d = l1 - l0
    z = jnp.exp(-jnp.abs(d))
    inv = pl.reciprocal(1.0 + z, approx=True)
    p1 = jnp.where(d >= 0, inv, z * inv)
    # Two full-lane-dense row stores (no concatenate, no masked narrow store).
    o_ref[0:1, :] = (1.0 - p1).astype(o_ref.dtype)
    o_ref[1:2, :] = p1.astype(o_ref.dtype)


def _round_up(n, m):
    return ((n + m - 1) // m) * m


def football_match_predictor(agg_stats, params, *, block_rows=4096):
    """agg_stats: (B, F) float32. params: PyTorch-oriented weights/biases.

    Returns (B, 2) softmax probabilities (f32), matching the nn.Module output.
    Note: matmuls run in bf16 with f32 accumulation; per-class probabilities
    carry ~1e-3 relative error vs a pure-f32 reference (row sums are exact).
    """
    B, F = agg_stats.shape

    # Column-major dataflow: batch on the 128-lane axis, fully dense DMAs.
    x_t = jnp.transpose(agg_stats)                 # (F, B) f32; bf16 cast in-kernel

    w1 = params["w1"].astype(jnp.bfloat16)         # (64, F)   PyTorch (out, in)
    w2 = params["w2"].astype(jnp.bfloat16)         # (32, 64)
    w3 = params["w3"].astype(jnp.bfloat16)         # (16, 32)
    w4 = params["w4"].astype(jnp.bfloat16)         # (2, 16)
    b1, b2, b3, b4 = params["b1"], params["b2"], params["b3"], params["b4"]  # (out, 1) f32

    # Tile policy: single tile for small batches; otherwise tiles are multiples
    # of 128 lanes, capped at block_rows, and at most ceil(B/2) so the grid has
    # >= 2 steps (keeps both v7x TensorCores busy). Last tile may be ragged:
    # Pallas masks out-of-bounds output writes.
    tb_cap = max(128, (block_rows // 128) * 128)
    if B <= 256:
        tb = B
    else:
        tb = min(tb_cap, _round_up(-(-B // 2), 128))
    grid = (pl.cdiv(B, tb),)

    def const_spec(a):
        return pl.BlockSpec(a.shape, lambda i: (0,) * a.ndim)

    flops = 2 * B * (F * 64 + 64 * 32 + 32 * 16 + 16 * 2)
    bytes_accessed = (B * F * 4 + B * 2 * 4 +
                      sum(int(a.size) * a.dtype.itemsize
                          for a in (w1, b1, w2, b2, w3, b3, w4, b4)))

    out = pl.pallas_call(
        _mlp_softmax_kernel,
        out_shape=jax.ShapeDtypeStruct((2, B), jnp.float32),
        grid=grid,
        in_specs=[
            pl.BlockSpec((F, tb), lambda i: (0, i)),   # x: streamed batch tiles
            const_spec(w1), const_spec(b1),            # weights/biases resident
            const_spec(w2), const_spec(b2),
            const_spec(w3), const_spec(b3),
            const_spec(w4), const_spec(b4),
        ],
        out_specs=pl.BlockSpec((2, tb), lambda i: (0, i)),
        compiler_params=pltpu.CompilerParams(
            dimension_semantics=("parallel",)),        # shard batch tiles on v7x
        cost_estimate=pl.CostEstimate(
            flops=flops, transcendentals=2 * B, bytes_accessed=bytes_accessed),
    )(x_t, w1, b1, w2, b2, w3, b3, w4, b4)

    return out.T                                       # (B, 2)


def init_params(key, input_agg_stats_size, hidden_size=64):
    """Deterministic synthetic parameters with the module's shapes.

    Weights are stored exactly as PyTorch does, (out_features, in_features);
    biases as (out_features, 1) so they broadcast along the lane (batch) axis.
    """
    h = hidden_size
    dims = [
        (input_agg_stats_size, h),   # agg_stats_fc[0]
        (h, h // 2),                 # agg_stats_fc[3]
        (h // 2, h // 4),            # fc_combined[0]
        (h // 4, 2),                 # fc_combined[2]
    ]
    params = {}
    for i, (fan_in, fan_out) in enumerate(dims, start=1):
        key, kw, kb = jax.random.split(key, 3)
        bound = 1.0 / jnp.sqrt(fan_in)  # matches nn.Linear default init range
        params[f"w{i}"] = jax.random.uniform(
            kw, (fan_out, fan_in), jnp.float32, -bound, bound)
        params[f"b{i}"] = jax.random.uniform(
            kb, (fan_out, 1), jnp.float32, -bound, bound)
    return params


def _reference(agg_stats, params):
    """Pure-JAX f32 reference of the same forward pass (eval mode)."""
    x = agg_stats
    x = jnp.maximum(x @ params["w1"].T + params["b1"].T, 0.0)
    x = jnp.maximum(x @ params["w2"].T + params["b2"].T, 0.0)
    x = jnp.maximum(x @ params["w3"].T + params["b3"].T, 0.0)
    logits = x @ params["w4"].T + params["b4"].T
    return jax.nn.softmax(logits, axis=1)


if __name__ == "__main__":
    key = jax.random.PRNGKey(0)
    input_agg_stats_size = 32
    hidden_size = 64

    key, kx, kp, kx2 = jax.random.split(key, 4)
    params = init_params(kp, input_agg_stats_size, hidden_size)

    # Small batch (single grid step, block == full array).
    batch = 8
    agg_stats = jax.random.normal(kx, (batch, input_agg_stats_size), jnp.float32)
    out = jax.block_until_ready(football_match_predictor(agg_stats, params))
    ref = _reference(agg_stats, params)
    assert out.shape == (batch, 2)
    assert jnp.allclose(jnp.sum(out, axis=1), 1.0, atol=1e-5)
    # bf16 matmul path + approx reciprocal -> looser tolerance vs f32 reference.
    assert jnp.allclose(out, ref, atol=2e-2, rtol=2e-2)

    # Larger, non-divisible batch: 2 grid steps of 256 lanes, ragged last tile
    # handled by Pallas OOB write masking (no wrapper padding/slicing).
    batch2 = 300
    agg_stats2 = jax.random.normal(kx2, (batch2, input_agg_stats_size), jnp.float32)
    out2 = jax.block_until_ready(football_match_predictor(agg_stats2, params))
    ref2 = _reference(agg_stats2, params)
    assert out2.shape == (batch2, 2)
    assert jnp.allclose(jnp.sum(out2, axis=1), 1.0, atol=1e-5)
    assert jnp.allclose(out2, ref2, atol=2e-2, rtol=2e-2)

    print("KERNEL_OK")
</pallas_src>

<mosaic_0001>
module attributes {stable_mosaic.version = 11 : i64} {
  func.func @_mlp_softmax_kernel(%arg0: i32, %arg1: memref<32x8xf32, #tpu.memory_space<vmem>>, %arg2: memref<64x32xbf16, #tpu.memory_space<vmem>>, %arg3: memref<64x1xf32, #tpu.memory_space<vmem>>, %arg4: memref<32x64xbf16, #tpu.memory_space<vmem>>, %arg5: memref<32x1xf32, #tpu.memory_space<vmem>>, %arg6: memref<16x32xbf16, #tpu.memory_space<vmem>>, %arg7: memref<16x1xf32, #tpu.memory_space<vmem>>, %arg8: memref<2x16xbf16, #tpu.memory_space<vmem>>, %arg9: memref<2x1xf32, #tpu.memory_space<vmem>>, %arg10: memref<2x8xf32, #tpu.memory_space<vmem>>) attributes {dimension_semantics = [#tpu.dimension_semantics<parallel>], iteration_bounds = array<i64: 1>, scalar_prefetch = 0 : i64, scratch_operands = 0 : i64, tpu.core_type = #tpu.core_type<tc>, window_params = [{transform_indices = @transform_0, window_bounds = array<i64: 32, 8>}, {pipeline_mode = #tpu.pipeline_mode<synchronous>, transform_indices = @transform_1, window_bounds = array<i64: 64, 32>}, {pipeline_mode = #tpu.pipeline_mode<synchronous>, transform_indices = @transform_2, window_bounds = array<i64: 64, 1>}, {pipeline_mode = #tpu.pipeline_mode<synchronous>, transform_indices = @transform_3, window_bounds = array<i64: 32, 64>}, {pipeline_mode = #tpu.pipeline_mode<synchronous>, transform_indices = @transform_4, window_bounds = array<i64: 32, 1>}, {pipeline_mode = #tpu.pipeline_mode<synchronous>, transform_indices = @transform_5, window_bounds = array<i64: 16, 32>}, {pipeline_mode = #tpu.pipeline_mode<synchronous>, transform_indices = @transform_6, window_bounds = array<i64: 16, 1>}, {pipeline_mode = #tpu.pipeline_mode<synchronous>, transform_indices = @transform_7, window_bounds = array<i64: 2, 16>}, {pipeline_mode = #tpu.pipeline_mode<synchronous>, transform_indices = @transform_8, window_bounds = array<i64: 2, 1>}, {transform_indices = @transform_9, window_bounds = array<i64: 2, 8>}]} {
    %c0 = arith.constant 0 : index
    %c0_0 = arith.constant 0 : index
    %0 = vector.load %arg1[%c0, %c0_0] : memref<32x8xf32, #tpu.memory_space<vmem>>, vector<32x8xf32>
    %1 = arith.truncf %0 : vector<32x8xf32> to vector<32x8xbf16>
    %c0_1 = arith.constant 0 : index
    %c0_2 = arith.constant 0 : index
    %2 = vector.load %arg2[%c0_1, %c0_2] : memref<64x32xbf16, #tpu.memory_space<vmem>>, vector<64x32xbf16>
    %cst = arith.constant dense<0.000000e+00> : vector<64x8xf32>
    %3 = tpu.matmul %2, %1, %cst {dimension_numbers = #tpu.dot_dimension_numbers<[1], [0], [0], [1], [0, 0, 1, 1], [], []>} : vector<64x32xbf16>, vector<32x8xbf16>, vector<64x8xf32> -> vector<64x8xf32>
    %c0_3 = arith.constant 0 : index
    %c0_4 = arith.constant 0 : index
    %4 = vector.load %arg3[%c0_3, %c0_4] : memref<64x1xf32, #tpu.memory_space<vmem>>, vector<64x1xf32>
    %5 = vector.broadcast %4 : vector<64x1xf32> to vector<64x8xf32>
    %6 = arith.addf %3, %5 : vector<64x8xf32>
    %cst_5 = arith.constant 0.000000e+00 : f32
    %7 = vector.broadcast %cst_5 : f32 to vector<64x8xf32>
    %8 = arith.maximumf %6, %7 : vector<64x8xf32>
    %c0_6 = arith.constant 0 : index
    %c0_7 = arith.constant 0 : index
    %9 = vector.load %arg4[%c0_6, %c0_7] : memref<32x64xbf16, #tpu.memory_space<vmem>>, vector<32x64xbf16>
    %10 = arith.truncf %8 : vector<64x8xf32> to vector<64x8xbf16>
    %cst_8 = arith.constant dense<0.000000e+00> : vector<32x8xf32>
    %11 = tpu.matmul %9, %10, %cst_8 {dimension_numbers = #tpu.dot_dimension_numbers<[1], [0], [0], [1], [0, 0, 1, 1], [], []>} : vector<32x64xbf16>, vector<64x8xbf16>, vector<32x8xf32> -> vector<32x8xf32>
    %c0_9 = arith.constant 0 : index
    %c0_10 = arith.constant 0 : index
    %12 = vector.load %arg5[%c0_9, %c0_10] : memref<32x1xf32, #tpu.memory_space<vmem>>, vector<32x1xf32>
    %13 = vector.broadcast %12 : vector<32x1xf32> to vector<32x8xf32>
    %14 = arith.addf %11, %13 : vector<32x8xf32>
    %cst_11 = arith.constant 0.000000e+00 : f32
    %15 = vector.broadcast %cst_11 : f32 to vector<32x8xf32>
    %16 = arith.maximumf %14, %15 : vector<32x8xf32>
    %c0_12 = arith.constant 0 : index
    %c0_13 = arith.constant 0 : index
    %17 = vector.load %arg6[%c0_12, %c0_13] : memref<16x32xbf16, #tpu.memory_space<vmem>>, vector<16x32xbf16>
    %18 = arith.truncf %16 : vector<32x8xf32> to vector<32x8xbf16>
    %cst_14 = arith.constant dense<0.000000e+00> : vector<16x8xf32>
    %19 = tpu.matmul %17, %18, %cst_14 {dimension_numbers = #tpu.dot_dimension_numbers<[1], [0], [0], [1], [0, 0, 1, 1], [], []>} : vector<16x32xbf16>, vector<32x8xbf16>, vector<16x8xf32> -> vector<16x8xf32>
    %c0_15 = arith.constant 0 : index
    %c0_16 = arith.constant 0 : index
    %20 = vector.load %arg7[%c0_15, %c0_16] : memref<16x1xf32, #tpu.memory_space<vmem>>, vector<16x1xf32>
    %21 = vector.broadcast %20 : vector<16x1xf32> to vector<16x8xf32>
    %22 = arith.addf %19, %21 : vector<16x8xf32>
    %cst_17 = arith.constant 0.000000e+00 : f32
    %23 = vector.broadcast %cst_17 : f32 to vector<16x8xf32>
    %24 = arith.maximumf %22, %23 : vector<16x8xf32>
    %c0_18 = arith.constant 0 : index
    %c0_19 = arith.constant 0 : index
    %25 = vector.load %arg8[%c0_18, %c0_19] : memref<2x16xbf16, #tpu.memory_space<vmem>>, vector<2x16xbf16>
    %26 = arith.truncf %24 : vector<16x8xf32> to vector<16x8xbf16>
    %cst_20 = arith.constant dense<0.000000e+00> : vector<2x8xf32>
    %27 = tpu.matmul %25, %26, %cst_20 {dimension_numbers = #tpu.dot_dimension_numbers<[1], [0], [0], [1], [0, 0, 1, 1], [], []>} : vector<2x16xbf16>, vector<16x8xbf16>, vector<2x8xf32> -> vector<2x8xf32>
    %c0_21 = arith.constant 0 : index
    %c0_22 = arith.constant 0 : index
    %28 = vector.load %arg9[%c0_21, %c0_22] : memref<2x1xf32, #tpu.memory_space<vmem>>, vector<2x1xf32>
    %29 = vector.broadcast %28 : vector<2x1xf32> to vector<2x8xf32>
    %30 = arith.addf %27, %29 : vector<2x8xf32>
    %31 = vector.extract_strided_slice %30 {offsets = [0, 0], sizes = [1, 8], strides = [1, 1]} : vector<2x8xf32> to vector<1x8xf32>
    %32 = vector.extract_strided_slice %30 {offsets = [1, 0], sizes = [1, 8], strides = [1, 1]} : vector<2x8xf32> to vector<1x8xf32>
    %33 = arith.subf %32, %31 : vector<1x8xf32>
    %34 = math.absf %33 : vector<1x8xf32>
    %cst_23 = arith.constant 0.000000e+00 : f32
    %35 = vector.broadcast %cst_23 : f32 to vector<1x8xf32>
    %36 = arith.subf %35, %34 : vector<1x8xf32>
    %37 = math.exp %36 : vector<1x8xf32>
    %cst_24 = arith.constant 1.000000e+00 : f32
    %38 = vector.broadcast %cst_24 : f32 to vector<1x8xf32>
    %39 = arith.addf %38, %37 : vector<1x8xf32>
    %40 = tpu.reciprocal %39 {approx = true} : vector<1x8xf32> -> vector<1x8xf32>
    %cst_25 = arith.constant 0.000000e+00 : f32
    %41 = vector.broadcast %cst_25 : f32 to vector<1x8xf32>
    %42 = arith.cmpf oge, %33, %41 : vector<1x8xf32>
    %43 = arith.mulf %37, %40 : vector<1x8xf32>
    %44 = arith.select %42, %40, %43 : vector<1x8xi1>, vector<1x8xf32>
    %cst_26 = arith.constant 1.000000e+00 : f32
    %45 = vector.broadcast %cst_26 : f32 to vector<1x8xf32>
    %46 = arith.subf %45, %44 : vector<1x8xf32>
    %c0_27 = arith.constant 0 : index
    %c0_28 = arith.constant 0 : index
    %47 = vector.load %arg10[%c0_27, %c0_28] : memref<2x8xf32, #tpu.memory_space<vmem>>, vector<1x8xf32>
    tpu.vector_store %arg10[%c0_27, %c0_28], %46 {strides = array<i32>} : memref<2x8xf32, #tpu.memory_space<vmem>>, vector<1x8xf32>,
    %c1 = arith.constant 1 : index
    %c0_29 = arith.constant 0 : index
    %48 = vector.load %arg10[%c1, %c0_29] : memref<2x8xf32, #tpu.memory_space<vmem>>, vector<1x8xf32>
    tpu.vector_store %arg10[%c1, %c0_29], %44 {strides = array<i32>} : memref<2x8xf32, #tpu.memory_space<vmem>>, vector<1x8xf32>,
    return
  }
  func.func @transform_0(%arg0: i32) -> (i32, i32) {
    %c0_i32 = arith.constant 0 : i32
    %c0_i32_0 = arith.constant 0 : i32
    return %c0_i32, %arg0 : i32, i32
  }
  func.func @transform_1(%arg0: i32) -> (i32, i32) {
    %c0_i32 = arith.constant 0 : i32
    %c0_i32_0 = arith.constant 0 : i32
    %c0_i32_1 = arith.constant 0 : i32
    return %c0_i32, %c0_i32_0 : i32, i32
  }
  func.func @transform_2(%arg0: i32) -> (i32, i32) {
    %c0_i32 = arith.constant 0 : i32
    %c0_i32_0 = arith.constant 0 : i32
    %c0_i32_1 = arith.constant 0 : i32
    return %c0_i32, %c0_i32_0 : i32, i32
  }
  func.func @transform_3(%arg0: i32) -> (i32, i32) {
    %c0_i32 = arith.constant 0 : i32
    %c0_i32_0 = arith.constant 0 : i32
    %c0_i32_1 = arith.constant 0 : i32
    return %c0_i32, %c0_i32_0 : i32, i32
  }
  func.func @transform_4(%arg0: i32) -> (i32, i32) {
    %c0_i32 = arith.constant 0 : i32
    %c0_i32_0 = arith.constant 0 : i32
    %c0_i32_1 = arith.constant 0 : i32
    return %c0_i32, %c0_i32_0 : i32, i32
  }
  func.func @transform_5(%arg0: i32) -> (i32, i32) {
    %c0_i32 = arith.constant 0 : i32
    %c0_i32_0 = arith.constant 0 : i32
    %c0_i32_1 = arith.constant 0 : i32
    return %c0_i32, %c0_i32_0 : i32, i32
  }
  func.func @transform_6(%arg0: i32) -> (i32, i32) {
    %c0_i32 = arith.constant 0 : i32
    %c0_i32_0 = arith.constant 0 : i32
    %c0_i32_1 = arith.constant 0 : i32
    return %c0_i32, %c0_i32_0 : i32, i32
  }
  func.func @transform_7(%arg0: i32) -> (i32, i32) {
    %c0_i32 = arith.constant 0 : i32
    %c0_i32_0 = arith.constant 0 : i32
    %c0_i32_1 = arith.constant 0 : i32
    return %c0_i32, %c0_i32_0 : i32, i32
  }
  func.func @transform_8(%arg0: i32) -> (i32, i32) {
    %c0_i32 = arith.constant 0 : i32
    %c0_i32_0 = arith.constant 0 : i32
    %c0_i32_1 = arith.constant 0 : i32
    return %c0_i32, %c0_i32_0 : i32, i32
  }
  func.func @transform_9(%arg0: i32) -> (i32, i32) {
    %c0_i32 = arith.constant 0 : i32
    %c0_i32_0 = arith.constant 0 : i32
    return %c0_i32, %arg0 : i32, i32
  }
}

</mosaic_0001>

<llo_original>
// kernel: tpu_custom_call.1
$region0: #{tpu_custom_call.1}
  #allocation0 [shape = 'u32[]', space=smem, size = 0x4, offset = 0x4, fixed_abs, tag = 'smem constant byte address 0x4 - core index']
  #allocation1 [shape = 'u32[144,128]{1,0:T(1,128)}', space=vmem, size = 0x12000, scoped, tag = 'internal scratch']
  %s0 = inlined_call_operand.vmem [shape: f32[32,8], index: 0, kind: input, shape index: {}]
  %s1 = inlined_call_operand.vmem [shape: bf16[64,32], index: 1, kind: input, shape index: {}]
  %s2 = inlined_call_operand.vmem [shape: f32[64,1], index: 2, kind: input, shape index: {}]
  %s3 = inlined_call_operand.vmem [shape: bf16[32,64], index: 3, kind: input, shape index: {}]
  %s4 = inlined_call_operand.vmem [shape: f32[32,1], index: 4, kind: input, shape index: {}]
  %s5 = inlined_call_operand.vmem [shape: bf16[16,32], index: 5, kind: input, shape index: {}]
  %s6 = inlined_call_operand.vmem [shape: f32[16,1], index: 6, kind: input, shape index: {}]
  %s7 = inlined_call_operand.vmem [shape: bf16[2,16], index: 7, kind: input, shape index: {}]
  %s8 = inlined_call_operand.vmem [shape: f32[2,1], index: 8, kind: input, shape index: {}]
  %s9 = inlined_call_operand.hbm [shape: f32[2,8], index: 9, kind: output, shape index: {}]
  %s10 = sld [smem:[#allocation0]]
  $region46: #{tpu_custom_call.1} parent=0
    _
  %s12 = ssub.s32 1, %s10
  %s13 = scalar_select 0, %s12, %s10
  $region1: #{tpu_custom_call.1} parent=0
    #allocation2 [shape = 'u8[1024]{0}', space=vmem, size = 0x400, scoped, tag = 'output window, operand 0, single buffered']
    #allocation3 [shape = 's32[1]{0}', space=sflag, size = 0x4, scoped, tag = 'scoped memory for tpu_custom_call.1']
    %14 = vsyncpa [#allocation3], 0
    // Predicated region
    $region2: #{tpu_custom_call.1} parent=1 // pred_check
      _
    $region3: #{tpu_custom_call.1} parent=1 // pred_check_branch
      %16 = sbr.rel (0) target = $region5
    $region4: #{tpu_custom_call.1} parent=1 // pred_region
      _
    $region5: #{tpu_custom_call.1} parent=1 // pred_fallthru
      _
    // Predicated region
    $region6: #{tpu_custom_call.1} parent=1 // pred_check
      _
    $region7: #{tpu_custom_call.1} parent=1 // pred_check_branch
      %18 = sbr.rel (0) target = $region9
    $region8: #{tpu_custom_call.1} parent=1 // pred_region
      _
    $region9: #{tpu_custom_call.1} parent=1 // pred_fallthru
      _
    // Predicated region
    $region10: #{tpu_custom_call.1} parent=1 // pred_check
      _
    $region11: #{tpu_custom_call.1} parent=1 // pred_check_branch
      %20 = sbr.rel (0) target = $region13
    $region12: #{tpu_custom_call.1} parent=1 // pred_region
      _
    $region13: #{tpu_custom_call.1} parent=1 // pred_fallthru
      _
    // Predicated region
    $region14: #{tpu_custom_call.1} parent=1 // pred_check
      _
    $region15: #{tpu_custom_call.1} parent=1 // pred_check_branch
      %22 = sbr.rel (0) target = $region17
    $region16: #{tpu_custom_call.1} parent=1 // pred_region
      _
    $region17: #{tpu_custom_call.1} parent=1 // pred_fallthru
      _
    // Predicated region
    $region18: #{tpu_custom_call.1} parent=1 // pred_check
      _
    $region19: #{tpu_custom_call.1} parent=1 // pred_check_branch
      %24 = sbr.rel (0) target = $region21
    $region20: #{tpu_custom_call.1} parent=1 // pred_region
      _
    $region21: #{tpu_custom_call.1} parent=1 // pred_fallthru
      _
    // Predicated region
    $region22: #{tpu_custom_call.1} parent=1 // pred_check
      _
    $region23: #{tpu_custom_call.1} parent=1 // pred_check_branch
      %26 = sbr.rel (0) target = $region25
    $region24: #{tpu_custom_call.1} parent=1 // pred_region
      _
    $region25: #{tpu_custom_call.1} parent=1 // pred_fallthru
      _
    // Predicated region
    $region26: #{tpu_custom_call.1} parent=1 // pred_check
      _
    $region27: #{tpu_custom_call.1} parent=1 // pred_check_branch
      %28 = sbr.rel (0) target = $region29
    $region28: #{tpu_custom_call.1} parent=1 // pred_region
      _
    $region29: #{tpu_custom_call.1} parent=1 // pred_fallthru
      _
    // Predicated region
    $region30: #{tpu_custom_call.1} parent=1 // pred_check
      _
    $region31: #{tpu_custom_call.1} parent=1 // pred_check_branch
      %30 = sbr.rel (0) target = $region33
    $region32: #{tpu_custom_call.1} parent=1 // pred_region
      _
    $region33: #{tpu_custom_call.1} parent=1 // pred_fallthru
      _
    // Predicated region
    $region34: #{tpu_custom_call.1} parent=1 // pred_check
      _
    $region35: #{tpu_custom_call.1} parent=1 // pred_check_branch
      %32 = sbr.rel (0) target = $region37
    $region36: #{tpu_custom_call.1} parent=1 // pred_region
      _
    $region37: #{tpu_custom_call.1} parent=1 // pred_fallthru
      _
    %v34 = vld [vmem:[%s0] sm:$0xff]
    %v35 = vld [vmem:[%s0 + $0x8] sm:$0xff]
    %v36 = vld [vmem:[%s0 + $0x10] sm:$0xff]
    %v37 = vld [vmem:[%s0 + $0x18] sm:$0xff]
    %v38 = vpack.c.bf16 %v35, %v34
    %v39 = vpack.c.bf16 %v37, %v36
    %v40 = vld [vmem:[%s1] sm:$0xf]
    %v41 = vld [vmem:[%s1 + $0x4] sm:$0xf]
    %v42 = vld [vmem:[%s1 + $0x8] sm:$0xf]
    %v43 = vld [vmem:[%s1 + $0xc] sm:$0xf]
    %v44 = vld [vmem:[%s1 + $0x10] sm:$0xf]
    %v45 = vld [vmem:[%s1 + $0x14] sm:$0xf]
    %v46 = vld [vmem:[%s1 + $0x18] sm:$0xf]
    %v47 = vld [vmem:[%s1 + $0x1c] sm:$0xf]
    %v48 = vld [vmem:[%s2] sm:$0xff]
    %v49 = vld [vmem:[%s2 + $0x8] sm:$0xff]
    %v50 = vld [vmem:[%s2 + $0x10] sm:$0xff]
    %v51 = vld [vmem:[%s2 + $0x18] sm:$0xff]
    %v52 = vld [vmem:[%s2 + $0x20] sm:$0xff]
    %v53 = vld [vmem:[%s2 + $0x28] sm:$0xff]
    %v54 = vld [vmem:[%s2 + $0x30] sm:$0xff]
    %v55 = vld [vmem:[%s2 + $0x38] sm:$0xff]
    %57 = vset.pattern.permute.xlu0 0
    %58 = vperm.xlu0 %57, %v48
    %v59 = vpop.permute.xlu0 %58
    %62 = vset.pattern.permute.xlu0 0
    %63 = vperm.xlu0 %62, %v49
    %v64 = vpop.permute.xlu0 %63
    %67 = vset.pattern.permute.xlu0 0
    %68 = vperm.xlu0 %67, %v50
    %v69 = vpop.permute.xlu0 %68
    %72 = vset.pattern.permute.xlu0 0
    %73 = vperm.xlu0 %72, %v51
    %v74 = vpop.permute.xlu0 %73
    %77 = vset.pattern.permute.xlu0 0
    %78 = vperm.xlu0 %77, %v52
    %v79 = vpop.permute.xlu0 %78
    %82 = vset.pattern.permute.xlu0 0
    %83 = vperm.xlu0 %82, %v53
    %v84 = vpop.permute.xlu0 %83
    %87 = vset.pattern.permute.xlu0 0
    %88 = vperm.xlu0 %87, %v54
    %v89 = vpop.permute.xlu0 %88
    %92 = vset.pattern.permute.xlu0 0
    %93 = vperm.xlu0 %92, %v55
    %v94 = vpop.permute.xlu0 %93
    %v104 = vunpack.c.l.b16 %v40
    %v105 = vunpack.c.l.b16 %v41
    %v106 = vunpack.c.l.b16 %v42
    %v107 = vunpack.c.l.b16 %v43
    %v108 = vunpack.c.l.b16 %v44
    %v109 = vunpack.c.l.b16 %v45
    %v110 = vunpack.c.l.b16 %v46
    %v111 = vunpack.c.l.b16 %v47
    %v112 = vpack.c.b16 %v105, %v104
    %v113 = vpack.c.b16 %v107, %v106
    %v114 = vpack.c.b16 %v109, %v108
    %v115 = vpack.c.b16 %v111, %v110
    %vm116 = vcmask 261120
    %v118 = vsel %vm116, %v112, 0
    %v121 = vsel %vm116, %v113, 0
    %v124 = vsel %vm116, %v114, 0
    %v127 = vsel %vm116, %v115, 0
    %129 = vmatprep.subr.bf16.mxu0 0
    %130 = vmatpush1.bf16.msra.mxu0 0
    %131 = vmatprep.subr.bf16.mxu0 0
    %132 = vmatpush1.bf16.msra.mxu0 0
    %133 = vmatprep.subr.bf16.mxu0 0
    %134 = vmatpush1.bf16.msra.mxu0 0
    %135 = vmatprep.subr.bf16.mxu0 0
    %136 = vmatpush1.bf16.msra.mxu0 0
    %137 = vmatprep.subr.bf16.mxu0 0
    %138 = vmatpush1.bf16.msra.mxu0 0
    %139 = vmatprep.subr.bf16.mxu0 0
    %140 = vmatpush1.bf16.msra.mxu0 0
    %141 = vmatprep.subr.bf16.mxu0 0
    %142 = vmatpush1.bf16.msra.mxu0 %v39
    %143 = vmatprep.subr.bf16.mxu0 0
    %144 = vmatpush1.bf16.msra.mxu0 %v38
    %145 = vmatprep.subr.bf16.mxu0 0
    %146 = vmatpush2.bf16.msra.mxu0 0
    %147 = vmatprep.subr.bf16.mxu0 0
    %148 = vmatpush2.bf16.msra.mxu0 0
    %149 = vmatprep.subr.bf16.mxu0 0
    %150 = vmatpush2.bf16.msra.mxu0 0
    %151 = vmatprep.subr.bf16.mxu0 0
    %152 = vmatpush2.bf16.msra.mxu0 0
    %153 = vmatprep.subr.bf16.mxu0 0
    %154 = vmatpush2.bf16.msra.mxu0 0
    %155 = vmatprep.subr.bf16.mxu0 0
    %156 = vmatpush2.bf16.msra.mxu0 0
    %157 = vmatprep.subr.bf16.mxu0 0
    %158 = vmatpush2.bf16.msra.mxu0 0
    %159 = vmatprep.subr.bf16.mxu0 0
    %160 = vmatpush2.bf16.msra.mxu0 0
    %161 = vmatprep.mubr.bf16.mxu0 0
    %162 = vmatmul.mubr.bf16.gmra.mxu0 %v118
    %v163 = vpop.f32.mrf.mxu0
    %v164 = vadd.f32 %v59, %v163
    %v165 = vpop.f32.mrf.mxu0
    %v166 = vpop.f32.mrf.mxu0
    %v167 = vadd.f32 %v64, %v166
    %v168 = vpop.f32.mrf.mxu0
    %169 = vmatprep.mubr.bf16.mxu0 0
    %170 = vmatmul.mubr.bf16.gmra.mxu0 %v121
    %v171 = vpop.f32.mrf.mxu0
    %v172 = vadd.f32 %v69, %v171
    %v173 = vpop.f32.mrf.mxu0
    %v174 = vpop.f32.mrf.mxu0
    %v175 = vadd.f32 %v74, %v174
    %v176 = vpop.f32.mrf.mxu0
    %177 = vmatprep.mubr.bf16.mxu0 0
    %178 = vmatmul.mubr.bf16.gmra.mxu0 %v124
    %v179 = vpop.f32.mrf.mxu0
    %v180 = vadd.f32 %v79, %v179
    %v181 = vpop.f32.mrf.mxu0
    %v182 = vpop.f32.mrf.mxu0
    %v183 = vadd.f32 %v84, %v182
    %v184 = vpop.f32.mrf.mxu0
    %185 = vmatprep.mubr.bf16.mxu0 0
    %186 = vmatmul.mubr.bf16.gmra.mxu0 %v127
    %v187 = vpop.f32.mrf.mxu0
    %v188 = vadd.f32 %v89, %v187
    %v189 = vpop.f32.mrf.mxu0
    %v190 = vpop.f32.mrf.mxu0
    %v191 = vadd.f32 %v94, %v190
    %v192 = vpop.f32.mrf.mxu0
    %193 = vdwg.mxu0
    %v194 = vmax.f32 %v164, 0.0
    %v195 = vmax.f32 %v167, 0.0
    %v196 = vmax.f32 %v172, 0.0
    %v197 = vmax.f32 %v175, 0.0
    %v198 = vmax.f32 %v180, 0.0
    %v199 = vmax.f32 %v183, 0.0
    %v200 = vmax.f32 %v188, 0.0
    %v201 = vmax.f32 %v191, 0.0
    %v202 = vld [vmem:[%s3] sm:$0xf]
    %v203 = vld [vmem:[%s3 + $0x4] sm:$0xf]
    %v204 = vld [vmem:[%s3 + $0x8] sm:$0xf]
    %v205 = vld [vmem:[%s3 + $0xc] sm:$0xf]
    %v206 = vpack.c.bf16 %v195, %v194
    %v207 = vpack.c.bf16 %v197, %v196
    %v208 = vpack.c.bf16 %v199, %v198
    %v209 = vpack.c.bf16 %v201, %v200
    %v210 = vld [vmem:[%s4] sm:$0xff]
    %v211 = vld [vmem:[%s4 + $0x8] sm:$0xff]
    %v212 = vld [vmem:[%s4 + $0x10] sm:$0xff]
    %v213 = vld [vmem:[%s4 + $0x18] sm:$0xff]
    %215 = vset.pattern.permute.xlu0 0
    %216 = vperm.xlu0 %215, %v210
    %v217 = vpop.permute.xlu0 %216
    %220 = vset.pattern.permute.xlu0 0
    %221 = vperm.xlu0 %220, %v211
    %v222 = vpop.permute.xlu0 %221
    %225 = vset.pattern.permute.xlu0 0
    %226 = vperm.xlu0 %225, %v212
    %v227 = vpop.permute.xlu0 %226
    %230 = vset.pattern.permute.xlu0 0
    %231 = vperm.xlu0 %230, %v213
    %v232 = vpop.permute.xlu0 %231
    %v238 = vunpack.c.l.b16 %v202
    %v239 = vunpack.c.l.b16 %v203
    %v240 = vunpack.c.l.b16 %v204
    %v241 = vunpack.c.l.b16 %v205
    %v242 = vpack.c.b16 %v239, %v238
    %v243 = vpack.c.b16 %v241, %v240
    %vm244 = vcmask 523264
    %v246 = vsel %vm244, %v242, 0
    %v249 = vsel %vm244, %v243, 0
    %251 = vmatprep.subr.bf16.mxu0 0
    %252 = vmatpush1.bf16.msra.mxu0 0
    %253 = vmatprep.subr.bf16.mxu0 0
    %254 = vmatpush1.bf16.msra.mxu0 0
    %255 = vmatprep.subr.bf16.mxu0 0
    %256 = vmatpush1.bf16.msra.mxu0 0
    %257 = vmatprep.subr.bf16.mxu0 0
    %258 = vmatpush1.bf16.msra.mxu0 0
    %259 = vmatprep.subr.bf16.mxu0 0
    %260 = vmatpush1.bf16.msra.mxu0 %v209
    %261 = vmatprep.subr.bf16.mxu0 0
    %262 = vmatpush1.bf16.msra.mxu0 %v208
    %263 = vmatprep.subr.bf16.mxu0 0
    %264 = vmatpush1.bf16.msra.mxu0 %v207
    %265 = vmatprep.subr.bf16.mxu0 0
    %266 = vmatpush1.bf16.msra.mxu0 %v206
    %267 = vmatprep.subr.bf16.mxu0 0
    %268 = vmatpush2.bf16.msra.mxu0 0
    %269 = vmatprep.subr.bf16.mxu0 0
    %270 = vmatpush2.bf16.msra.mxu0 0
    %271 = vmatprep.subr.bf16.mxu0 0
    %272 = vmatpush2.bf16.msra.mxu0 0
    %273 = vmatprep.subr.bf16.mxu0 0
    %274 = vmatpush2.bf16.msra.mxu0 0
    %275 = vmatprep.subr.bf16.mxu0 0
    %276 = vmatpush2.bf16.msra.mxu0 0
    %277 = vmatprep.subr.bf16.mxu0 0
    %278 = vmatpush2.bf16.msra.mxu0 0
    %279 = vmatprep.subr.bf16.mxu0 0
    %280 = vmatpush2.bf16.msra.mxu0 0
    %281 = vmatprep.subr.bf16.mxu0 0
    %282 = vmatpush2.bf16.msra.mxu0 0
    %283 = vmatprep.mubr.bf16.mxu0 0
    %284 = vmatmul.mubr.bf16.gmra.mxu0 %v246
    %v285 = vpop.f32.mrf.mxu0
    %v286 = vadd.f32 %v217, %v285
    %v287 = vpop.f32.mrf.mxu0
    %v288 = vpop.f32.mrf.mxu0
    %v289 = vadd.f32 %v222, %v288
    %v290 = vpop.f32.mrf.mxu0
    %291 = vmatprep.mubr.bf16.mxu0 0
    %292 = vmatmul.mubr.bf16.gmra.mxu0 %v249
    %v293 = vpop.f32.mrf.mxu0
    %v294 = vadd.f32 %v227, %v293
    %v295 = vpop.f32.mrf.mxu0
    %v296 = vpop.f32.mrf.mxu0
    %v297 = vadd.f32 %v232, %v296
    %v298 = vpop.f32.mrf.mxu0
    %299 = vdwg.mxu0
    %v300 = vmax.f32 %v286, 0.0
    %v301 = vmax.f32 %v289, 0.0
    %v302 = vmax.f32 %v294, 0.0
    %v303 = vmax.f32 %v297, 0.0
    %v304 = vld [vmem:[%s5] sm:$0xf]
    %v305 = vld [vmem:[%s5 + $0x4] sm:$0xf]
    %v306 = vpack.c.bf16 %v301, %v300
    %v307 = vpack.c.bf16 %v303, %v302
    %v308 = vld [vmem:[%s6] sm:$0xff]
    %v309 = vld [vmem:[%s6 + $0x8] sm:$0xff]
    %311 = vset.pattern.permute.xlu0 0
    %312 = vperm.xlu0 %311, %v308
    %v313 = vpop.permute.xlu0 %312
    %316 = vset.pattern.permute.xlu0 0
    %317 = vperm.xlu0 %316, %v309
    %v318 = vpop.permute.xlu0 %317
    %v322 = vunpack.c.l.b16 %v304
    %v323 = vunpack.c.l.b16 %v305
    %v324 = vpack.c.b16 %v323, %v322
    %v326 = vsel %vm116, %v324, 0
    %328 = vmatprep.subr.bf16.mxu0 0
    %329 = vmatpush1.bf16.msra.mxu0 0
    %330 = vmatprep.subr.bf16.mxu0 0
    %331 = vmatpush1.bf16.msra.mxu0 0
    %332 = vmatprep.subr.bf16.mxu0 0
    %333 = vmatpush1.bf16.msra.mxu0 0
    %334 = vmatprep.subr.bf16.mxu0 0
    %335 = vmatpush1.bf16.msra.mxu0 0
    %336 = vmatprep.subr.bf16.mxu0 0
    %337 = vmatpush1.bf16.msra.mxu0 0
    %338 = vmatprep.subr.bf16.mxu0 0
    %339 = vmatpush1.bf16.msra.mxu0 0
    %340 = vmatprep.subr.bf16.mxu0 0
    %341 = vmatpush1.bf16.msra.mxu0 %v307
    %342 = vmatprep.subr.bf16.mxu0 0
    %343 = vmatpush1.bf16.msra.mxu0 %v306
    %344 = vmatprep.subr.bf16.mxu0 0
    %345 = vmatpush2.bf16.msra.mxu0 0
    %346 = vmatprep.subr.bf16.mxu0 0
    %347 = vmatpush2.bf16.msra.mxu0 0
    %348 = vmatprep.subr.bf16.mxu0 0
    %349 = vmatpush2.bf16.msra.mxu0 0
    %350 = vmatprep.subr.bf16.mxu0 0
    %351 = vmatpush2.bf16.msra.mxu0 0
    %352 = vmatprep.subr.bf16.mxu0 0
    %353 = vmatpush2.bf16.msra.mxu0 0
    %354 = vmatprep.subr.bf16.mxu0 0
    %355 = vmatpush2.bf16.msra.mxu0 0
    %356 = vmatprep.subr.bf16.mxu0 0
    %357 = vmatpush2.bf16.msra.mxu0 0
    %358 = vmatprep.subr.bf16.mxu0 0
    %359 = vmatpush2.bf16.msra.mxu0 0
    %360 = vmatprep.mubr.bf16.mxu0 0
    %361 = vmatmul.mubr.bf16.gmra.mxu0 %v326
    %v362 = vpop.f32.mrf.mxu0
    %v363 = vadd.f32 %v313, %v362
    %v364 = vpop.f32.mrf.mxu0
    %v365 = vpop.f32.mrf.mxu0
    %v366 = vadd.f32 %v318, %v365
    %v367 = vpop.f32.mrf.mxu0
    %368 = vdwg.mxu0
    %v369 = vmax.f32 %v363, 0.0
    %v370 = vmax.f32 %v366, 0.0
    %v371 = vld [vmem:[%s7] sm:$0x1]
    %v372 = vpack.c.bf16 %v370, %v369
    %v373 = vld [vmem:[%s8] sm:$0x3]
    %375 = vset.pattern.permute.xlu0 0
    %376 = vperm.xlu0 %375, %v373
    %v377 = vpop.permute.xlu0 %376
    %vm379 = vcmask 130048
    %v381 = vsel %vm379, %v371, 0
    %383 = vmatprep.subr.bf16.mxu0 0
    %384 = vmatpush1.bf16.msra.mxu0 0
    %385 = vmatprep.subr.bf16.mxu0 0
    %386 = vmatpush1.bf16.msra.mxu0 0
    %387 = vmatprep.subr.bf16.mxu0 0
    %388 = vmatpush1.bf16.msra.mxu0 0
    %389 = vmatprep.subr.bf16.mxu0 0
    %390 = vmatpush1.bf16.msra.mxu0 0
    %391 = vmatprep.subr.bf16.mxu0 0
    %392 = vmatpush1.bf16.msra.mxu0 0
    %393 = vmatprep.subr.bf16.mxu0 0
    %394 = vmatpush1.bf16.msra.mxu0 0
    %395 = vmatprep.subr.bf16.mxu0 0
    %396 = vmatpush1.bf16.msra.mxu0 0
    %397 = vmatprep.subr.bf16.mxu0 0
    %398 = vmatpush1.bf16.msra.mxu0 %v372
    %399 = vmatprep.subr.bf16.mxu0 0
    %400 = vmatpush2.bf16.msra.mxu0 0
    %401 = vmatprep.subr.bf16.mxu0 0
    %402 = vmatpush2.bf16.msra.mxu0 0
    %403 = vmatprep.subr.bf16.mxu0 0
    %404 = vmatpush2.bf16.msra.mxu0 0
    %405 = vmatprep.subr.bf16.mxu0 0
    %406 = vmatpush2.bf16.msra.mxu0 0
    %407 = vmatprep.subr.bf16.mxu0 0
    %408 = vmatpush2.bf16.msra.mxu0 0
    %409 = vmatprep.subr.bf16.mxu0 0
    %410 = vmatpush2.bf16.msra.mxu0 0
    %411 = vmatprep.subr.bf16.mxu0 0
    %412 = vmatpush2.bf16.msra.mxu0 0
    %413 = vmatprep.subr.bf16.mxu0 0
    %414 = vmatpush2.bf16.msra.mxu0 0
    %415 = vmatprep.mubr.bf16.mxu0 0
    %416 = vmatmul.mubr.bf16.gmra.mxu0 %v381
    %v417 = vpop.f32.mrf.mxu0
    %v418 = vadd.f32 %v377, %v417
    %v419 = vpop.f32.mrf.mxu0
    %v420 = vpop.f32.mrf.mxu0
    %v421 = vpop.f32.mrf.mxu0
    %422 = vdwg.mxu0
    %v424 = vrot.slane %v418, 7
    %v426 = vsub.f32 %v418, %v424
    %v427 = vand.u32 2147483647, %v426
    %v428 = vsub.f32 0.0, %v427
    %v429 = vmul.f32 %v428, 1.442695
    %v430 = vpow.pop %v429
    %v431 = vadd.f32 %v430, 1.0
    %v432 = vrcp.pop %v431
    %vm433 = vcmp.ge.f32.partialorder %v426, 0.0
    %v434 = vmul.f32 %v430, %v432
    %v435 = vsel %vm433, %v432, %v434
    %v436 = vsub.f32 1.0, %v435
    %vm437 = vcmask 58369
    %438 = vst.msk [vmem:[#allocation2 - $0x1] sm:$0x2] %vm437, %v436
    %439 = vst.msk [vmem:[#allocation2] sm:$0x2] %vm437, %v435
    // Predicated region
    $region38: #{tpu_custom_call.1} parent=1 // pred_check
      _
    $region39: #{tpu_custom_call.1} parent=1 // pred_check_branch
      %441 = sbr.rel (0) target = $region41
    $region40: #{tpu_custom_call.1} parent=1 // pred_region
      %s443 = ssub.s32 32, 32
      %444 = vsyncadd [#allocation3], %s443
      %s446 = sshll.u32 [#allocation2], 4
      %s447 = int_to_ptr.vmem [resolvable:$true] %s446
      %449 = dma.vmem_to_hbm [thread:$0]  %s447, 32, %s9, [#allocation3]
    $region41: #{tpu_custom_call.1} parent=1 // pred_fallthru
      _
    // Predicated region
    $region42: #{tpu_custom_call.1} parent=1 // pred_check
      _
    $region43: #{tpu_custom_call.1} parent=1 // pred_check_branch
      %451 = sbr.rel (0) target = $region45
    $region44: #{tpu_custom_call.1} parent=1 // pred_region
      %452 = dma.done [#allocation3], 32
    $region45: #{tpu_custom_call.1} parent=1 // pred_fallthru
      _
    %453 = vsyncpa [#allocation3], 1

</llo_original>
